<compile_context>
chip_gen: v7x
topology: tpu7x:2x2x1
jax: 0.10.0
libtpu: 0.0.40
codegen_flags: <defaults>
</compile_context>

<pallas_src>
import functools

import jax
import jax.numpy as jnp
from jax.experimental import pallas as pl
from jax.experimental.pallas import tpu as pltpu

IN_F = 20
HID_F = 256
OUT_F = 10
DEFAULT_TILE_B = 4096   # rows per grid step (multiple of 8); ~12 MiB/step VMEM in f32


def mlp_kernel(x_ref, w1_ref, b1_ref, w2_ref, b2_ref, o_ref):
    # hidden = relu(x @ W1 + b1); MXU dots accumulate in f32.
    h = jnp.dot(x_ref[...], w1_ref[...], preferred_element_type=jnp.float32)
    h = jnp.maximum(h + b1_ref[...], 0.0)                 # (tb, 256) f32 VPU work
    # Cast h to the weight dtype only when W2 is sub-32-bit (trace-time decision;
    # avoids a pointless f32->bf16 VPU cast on the pure-f32 path).
    h_mm = h if w2_ref.dtype == jnp.float32 else h.astype(w2_ref.dtype)
    # out = hidden @ W2 + b2 -> (tb, 10) store (masked vst; DMA bytes dominate).
    out = jnp.dot(h_mm, w2_ref[...], preferred_element_type=jnp.float32)
    o_ref[...] = (out + b2_ref[...]).astype(o_ref.dtype)


@functools.partial(jax.jit, static_argnames=("tile_b",))
def mlp_forward(x, w1, b1, w2, b2, *, tile_b=DEFAULT_TILE_B):
    """Forward pass: relu(x @ w1 + b1) @ w2 + b2, returned as f32 (B, 10)."""
    B = x.shape[0]

    # Block rows must be a multiple of 8 (sublane); the batch itself need NOT be a
    # multiple of the tile — Pallas pads the ragged trailing input block and masks
    # the trailing output store.  Safe here: no cross-row reduction in the kernel.
    tb = min(tile_b, max(8, ((B + 7) // 8) * 8))
    grid = (pl.cdiv(B, tb),)

    bytes_in = B * IN_F * x.dtype.itemsize
    bytes_w = (IN_F * HID_F * w1.dtype.itemsize + HID_F * b1.dtype.itemsize
               + HID_F * OUT_F * w2.dtype.itemsize + OUT_F * b2.dtype.itemsize)
    cost = pl.CostEstimate(
        flops=2 * B * (IN_F * HID_F + HID_F * OUT_F),
        transcendentals=0,
        bytes_accessed=bytes_in + bytes_w + B * OUT_F * 4,
    )

    return pl.pallas_call(
        mlp_kernel,
        out_shape=jax.ShapeDtypeStruct((B, OUT_F), jnp.float32),
        grid_spec=pltpu.PrefetchScalarGridSpec(
            num_scalar_prefetch=0,
            grid=grid,
            in_specs=[
                pl.BlockSpec((tb, IN_F), lambda i: (i, 0)),       # x: streamed tiles
                pl.BlockSpec((IN_F, HID_F), lambda i: (0, 0)),    # w1: VMEM-resident
                pl.BlockSpec((1, HID_F), lambda i: (0, 0)),       # b1: VMEM-resident
                pl.BlockSpec((HID_F, OUT_F), lambda i: (0, 0)),   # w2: VMEM-resident
                pl.BlockSpec((1, OUT_F), lambda i: (0, 0)),       # b2: VMEM-resident
            ],
            out_specs=pl.BlockSpec((tb, OUT_F), lambda i: (i, 0)),
        ),
        compiler_params=pltpu.CompilerParams(
            dimension_semantics=("parallel",),   # shard batch tiles across TCs (v7x)
            vmem_limit_bytes=48 * 1024 * 1024,   # v7x-safe (<64 MiB/TC physical)
        ),
        cost_estimate=cost,
    )(x, w1, b1, w2, b2)


def init_params(key):
    # Deterministic init mimicking PyTorch nn.Linear default:
    # U(-1/sqrt(fan_in), 1/sqrt(fan_in)) for both weight and bias.
    k1, k2, k3, k4 = jax.random.split(key, 4)
    bound1 = 1.0 / (IN_F ** 0.5)
    bound2 = 1.0 / (HID_F ** 0.5)
    w1 = jax.random.uniform(k1, (IN_F, HID_F), jnp.float32, -bound1, bound1)
    b1 = jax.random.uniform(k2, (1, HID_F), jnp.float32, -bound1, bound1)
    w2 = jax.random.uniform(k3, (HID_F, OUT_F), jnp.float32, -bound2, bound2)
    b2 = jax.random.uniform(k4, (1, OUT_F), jnp.float32, -bound2, bound2)
    return w1, b1, w2, b2


def _ref(x, w1, b1, w2, b2):
    return jnp.maximum(x @ w1 + b1, 0.0) @ w2 + b2


if __name__ == "__main__":
    key = jax.random.PRNGKey(0)
    kx, kp = jax.random.split(key)
    w1, b1, w2, b2 = init_params(kp)

    # 1) Tiny batch (module-spec scale), f32 path, single partial block.
    x_small = jax.random.normal(kx, (2, IN_F), jnp.float32)
    out_small = mlp_forward(x_small, w1, b1, w2, b2)
    jax.block_until_ready(out_small)
    assert out_small.shape == (2, OUT_F)
    assert jnp.allclose(out_small, _ref(x_small, w1, b1, w2, b2), atol=1e-5, rtol=1e-5)

    # 2) Non-multiple batch, multi-step grid with a ragged trailing block, f32.
    x_big = jax.random.normal(kx, (300, IN_F), jnp.float32)
    out_big = mlp_forward(x_big, w1, b1, w2, b2, tile_b=128)
    jax.block_until_ready(out_big)
    assert out_big.shape == (300, OUT_F)
    assert jnp.allclose(out_big, _ref(x_big, w1, b1, w2, b2), atol=1e-5, rtol=1e-5)

    # 3) Caller-supplied bf16 x/weights (MXU bf16 operands, f32 accumulation and
    #    f32 bias/ReLU), loose tolerance vs the f32 reference.
    x_bf = x_big.astype(jnp.bfloat16)
    out_bf = mlp_forward(x_bf, w1.astype(jnp.bfloat16), b1,
                         w2.astype(jnp.bfloat16), b2, tile_b=128)
    jax.block_until_ready(out_bf)
    assert out_bf.shape == (300, OUT_F)
    assert jnp.allclose(out_bf, _ref(x_big, w1, b1, w2, b2), atol=5e-2, rtol=5e-2)

    print("KERNEL_OK")
</pallas_src>

<mosaic_0001>
module attributes {stable_mosaic.version = 11 : i64} {
  func.func @mlp_kernel(%arg0: i32, %arg1: memref<8x20xf32, #tpu.memory_space<vmem>>, %arg2: memref<20x256xf32, #tpu.memory_space<vmem>>, %arg3: memref<1x256xf32, #tpu.memory_space<vmem>>, %arg4: memref<256x10xf32, #tpu.memory_space<vmem>>, %arg5: memref<1x10xf32, #tpu.memory_space<vmem>>, %arg6: memref<8x10xf32, #tpu.memory_space<vmem>>) attributes {dimension_semantics = [#tpu.dimension_semantics<parallel>], iteration_bounds = array<i64: 1>, scalar_prefetch = 0 : i64, scratch_operands = 0 : i64, tpu.core_type = #tpu.core_type<tc>, window_params = [{transform_indices = @transform_0, window_bounds = array<i64: 8, 20>}, {pipeline_mode = #tpu.pipeline_mode<synchronous>, transform_indices = @transform_1, window_bounds = array<i64: 20, 256>}, {pipeline_mode = #tpu.pipeline_mode<synchronous>, transform_indices = @transform_2, window_bounds = array<i64: 1, 256>}, {pipeline_mode = #tpu.pipeline_mode<synchronous>, transform_indices = @transform_3, window_bounds = array<i64: 256, 10>}, {pipeline_mode = #tpu.pipeline_mode<synchronous>, transform_indices = @transform_4, window_bounds = array<i64: 1, 10>}, {transform_indices = @transform_5, window_bounds = array<i64: 8, 10>}]} {
    %c0 = arith.constant 0 : index
    %c0_0 = arith.constant 0 : index
    %0 = vector.load %arg1[%c0, %c0_0] : memref<8x20xf32, #tpu.memory_space<vmem>>, vector<8x20xf32>
    %c0_1 = arith.constant 0 : index
    %c0_2 = arith.constant 0 : index
    %1 = vector.load %arg2[%c0_1, %c0_2] : memref<20x256xf32, #tpu.memory_space<vmem>>, vector<20x256xf32>
    %cst = arith.constant dense<0.000000e+00> : vector<8x256xf32>
    %2 = tpu.matmul %0, %1, %cst {dimension_numbers = #tpu.dot_dimension_numbers<[1], [0], [0], [1], [0, 0, 1, 1], [], []>} : vector<8x20xf32>, vector<20x256xf32>, vector<8x256xf32> -> vector<8x256xf32>
    %c0_3 = arith.constant 0 : index
    %c0_4 = arith.constant 0 : index
    %3 = vector.load %arg3[%c0_3, %c0_4] : memref<1x256xf32, #tpu.memory_space<vmem>>, vector<1x256xf32>
    %4 = vector.broadcast %3 : vector<1x256xf32> to vector<8x256xf32>
    %5 = arith.addf %2, %4 : vector<8x256xf32>
    %cst_5 = arith.constant 0.000000e+00 : f32
    %6 = vector.broadcast %cst_5 : f32 to vector<8x256xf32>
    %7 = arith.maximumf %5, %6 : vector<8x256xf32>
    %c0_6 = arith.constant 0 : index
    %c0_7 = arith.constant 0 : index
    %8 = vector.load %arg4[%c0_6, %c0_7] : memref<256x10xf32, #tpu.memory_space<vmem>>, vector<256x10xf32>
    %cst_8 = arith.constant dense<0.000000e+00> : vector<8x10xf32>
    %9 = tpu.matmul %7, %8, %cst_8 {dimension_numbers = #tpu.dot_dimension_numbers<[1], [0], [0], [1], [0, 0, 1, 1], [], []>} : vector<8x256xf32>, vector<256x10xf32>, vector<8x10xf32> -> vector<8x10xf32>
    %c0_9 = arith.constant 0 : index
    %c0_10 = arith.constant 0 : index
    %10 = vector.load %arg5[%c0_9, %c0_10] : memref<1x10xf32, #tpu.memory_space<vmem>>, vector<1x10xf32>
    %11 = vector.broadcast %10 : vector<1x10xf32> to vector<8x10xf32>
    %12 = arith.addf %9, %11 : vector<8x10xf32>
    %c0_11 = arith.constant 0 : index
    %c0_12 = arith.constant 0 : index
    %13 = vector.load %arg6[%c0_11, %c0_12] : memref<8x10xf32, #tpu.memory_space<vmem>>, vector<8x10xf32>
    tpu.vector_store %arg6[%c0_11, %c0_12], %12 {strides = array<i32>} : memref<8x10xf32, #tpu.memory_space<vmem>>, vector<8x10xf32>,
    return
  }
  func.func @transform_0(%arg0: i32) -> (i32, i32) {
    %c0_i32 = arith.constant 0 : i32
    %c0_i32_0 = arith.constant 0 : i32
    return %arg0, %c0_i32 : i32, i32
  }
  func.func @transform_1(%arg0: i32) -> (i32, i32) {
    %c0_i32 = arith.constant 0 : i32
    %c0_i32_0 = arith.constant 0 : i32
    %c0_i32_1 = arith.constant 0 : i32
    return %c0_i32, %c0_i32_0 : i32, i32
  }
  func.func @transform_2(%arg0: i32) -> (i32, i32) {
    %c0_i32 = arith.constant 0 : i32
    %c0_i32_0 = arith.constant 0 : i32
    %c0_i32_1 = arith.constant 0 : i32
    return %c0_i32, %c0_i32_0 : i32, i32
  }
  func.func @transform_3(%arg0: i32) -> (i32, i32) {
    %c0_i32 = arith.constant 0 : i32
    %c0_i32_0 = arith.constant 0 : i32
    %c0_i32_1 = arith.constant 0 : i32
    return %c0_i32, %c0_i32_0 : i32, i32
  }
  func.func @transform_4(%arg0: i32) -> (i32, i32) {
    %c0_i32 = arith.constant 0 : i32
    %c0_i32_0 = arith.constant 0 : i32
    %c0_i32_1 = arith.constant 0 : i32
    return %c0_i32, %c0_i32_0 : i32, i32
  }
  func.func @transform_5(%arg0: i32) -> (i32, i32) {
    %c0_i32 = arith.constant 0 : i32
    %c0_i32_0 = arith.constant 0 : i32
    return %arg0, %c0_i32 : i32, i32
  }
}

</mosaic_0001>

<llo_original>
// kernel: mlp_forward.1
$region0: #{mlp_forward.1}
  #allocation0 [shape = 'u32[]', space=smem, size = 0x4, offset = 0x4, fixed_abs, tag = 'smem constant byte address 0x4 - core index']
  #allocation1 [shape = 'u32[144,128]{1,0:T(1,128)}', space=vmem, size = 0x12000, scoped, tag = 'internal scratch']
  %s0 = inlined_call_operand.vmem [shape: f32[2,20], index: 0, kind: input, shape index: {}]
  %s1 = inlined_call_operand.vmem [shape: f32[20,256], index: 1, kind: input, shape index: {}]
  %s2 = inlined_call_operand.vmem [shape: f32[1,256], index: 2, kind: input, shape index: {}]
  %s3 = inlined_call_operand.vmem [shape: f32[256,10], index: 3, kind: input, shape index: {}]
  %s4 = inlined_call_operand.vmem [shape: f32[1,10], index: 4, kind: input, shape index: {}]
  %s5 = inlined_call_operand.hbm [shape: f32[2,10], index: 5, kind: output, shape index: {}]
  %s6 = sld [smem:[#allocation0]]
  $region30: #{mlp_forward.1} parent=0
    _
  %s8 = ssub.s32 1, %s6
  %s9 = scalar_select 0, %s8, %s6
  $region1: #{mlp_forward.1} parent=0
    #allocation2 [shape = 'u8[4096]{0}', space=vmem, size = 0x1000, scoped, tag = 'output window, operand 0, single buffered']
    #allocation3 [shape = 's32[1]{0}', space=sflag, size = 0x4, scoped, tag = 'scoped memory for mlp_forward.1']
    %10 = vsyncpa [#allocation3], 0
    // Predicated region
    $region2: #{mlp_forward.1} parent=1 // pred_check
      _
    $region3: #{mlp_forward.1} parent=1 // pred_check_branch
      %12 = sbr.rel (0) target = $region5
    $region4: #{mlp_forward.1} parent=1 // pred_region
      _
    $region5: #{mlp_forward.1} parent=1 // pred_fallthru
      _
    // Predicated region
    $region6: #{mlp_forward.1} parent=1 // pred_check
      _
    $region7: #{mlp_forward.1} parent=1 // pred_check_branch
      %14 = sbr.rel (0) target = $region9
    $region8: #{mlp_forward.1} parent=1 // pred_region
      _
    $region9: #{mlp_forward.1} parent=1 // pred_fallthru
      _
    // Predicated region
    $region10: #{mlp_forward.1} parent=1 // pred_check
      _
    $region11: #{mlp_forward.1} parent=1 // pred_check_branch
      %16 = sbr.rel (0) target = $region13
    $region12: #{mlp_forward.1} parent=1 // pred_region
      _
    $region13: #{mlp_forward.1} parent=1 // pred_fallthru
      _
    // Predicated region
    $region14: #{mlp_forward.1} parent=1 // pred_check
      _
    $region15: #{mlp_forward.1} parent=1 // pred_check_branch
      %18 = sbr.rel (0) target = $region17
    $region16: #{mlp_forward.1} parent=1 // pred_region
      _
    $region17: #{mlp_forward.1} parent=1 // pred_fallthru
      _
    // Predicated region
    $region18: #{mlp_forward.1} parent=1 // pred_check
      _
    $region19: #{mlp_forward.1} parent=1 // pred_check_branch
      %20 = sbr.rel (0) target = $region21
    $region20: #{mlp_forward.1} parent=1 // pred_region
      _
    $region21: #{mlp_forward.1} parent=1 // pred_fallthru
      _
    %v21 = vld [vmem:[%s0] sm:$0xff]
    %v22 = vld [vmem:[%s1] sm:$0xff]
    %v23 = vld [vmem:[%s1 + $0x8] sm:$0xff]
    %v24 = vld [vmem:[%s1 + $0x10] sm:$0xff]
    %v25 = vld [vmem:[%s1 + $0x18] sm:$0xff]
    %v26 = vld [vmem:[%s1 + $0x20] sm:$0xf]
    %v27 = vld [vmem:[%s1 + $0x28] sm:$0xf]
    %v28 = vld [vmem:[%s2] sm:$0x3]
    %v30 = vlaneseq
    %v31 = vshrl.u32 %v30, 7
    %v32 = vsub.s32 0, %v31
    %v33 = vrot.slane %v28, %v32
    %v34 = vlaneseq
    %v35 = vshrl.u32 %v34, 7
    %v36 = vsub.s32 1, %v35
    %v37 = vrot.slane %v28, %v36
    %vm40 = vcmask 162816
    %v42 = vsel %vm40, %v21, 0
    %vm44 = vcmask 1043456
    %v46 = vsel %vm44, %v26, 0
    %v49 = vsel %vm44, %v27, 0
    %51 = vmatprep.subr.mxu0 %v23
    %52 = vmatpush1.msra.mxu0 %v22
    %53 = vmatprep.subr.mxu0 %v25
    %54 = vmatpush1.msra.mxu0 %v24
    %55 = vmatprep.subr.mxu0 %v49
    %56 = vmatpush1.msra.mxu0 %v46
    %57 = vmatprep.subr.mxu0 0.0
    %58 = vmatpush1.msra.mxu0 0.0
    %59 = vmatprep.subr.mxu0 0.0
    %60 = vmatpush1.msra.mxu0 0.0
    %61 = vmatprep.subr.mxu0 0.0
    %62 = vmatpush1.msra.mxu0 0.0
    %63 = vmatprep.subr.mxu0 0.0
    %64 = vmatpush1.msra.mxu0 0.0
    %65 = vmatprep.subr.mxu0 0.0
    %66 = vmatpush1.msra.mxu0 0.0
    %67 = vmatprep.subr.mxu0 0.0
    %68 = vmatpush1.msra.mxu0 0.0
    %69 = vmatprep.subr.mxu0 0.0
    %70 = vmatpush1.msra.mxu0 0.0
    %71 = vmatprep.subr.mxu0 0.0
    %72 = vmatpush1.msra.mxu0 0.0
    %73 = vmatprep.subr.mxu0 0.0
    %74 = vmatpush1.msra.mxu0 0.0
    %75 = vmatprep.subr.mxu0 0.0
    %76 = vmatpush1.msra.mxu0 0.0
    %77 = vmatprep.subr.mxu0 0.0
    %78 = vmatpush1.msra.mxu0 0.0
    %79 = vmatprep.subr.mxu0 0.0
    %80 = vmatpush1.msra.mxu0 0.0
    %81 = vmatprep.subr.mxu0 0.0
    %82 = vmatpush1.msra.mxu0 0.0
    %83 = vmatprep.subr.mxu0 0.0
    %84 = vmatpush1.msra.mxu0 0.0
    %85 = vmatprep.subr.mxu0 0.0
    %86 = vmatpush1.msra.mxu0 0.0
    %87 = vmatprep.subr.mxu0 0.0
    %88 = vmatpush1.msra.mxu0 0.0
    %89 = vmatprep.subr.mxu0 0.0
    %90 = vmatpush1.msra.mxu0 0.0
    %91 = vmatprep.subr.mxu0 0.0
    %92 = vmatpush1.msra.mxu0 0.0
    %93 = vmatprep.subr.mxu0 0.0
    %94 = vmatpush1.msra.mxu0 0.0
    %95 = vmatprep.subr.mxu0 0.0
    %96 = vmatpush1.msra.mxu0 0.0
    %97 = vmatprep.subr.mxu0 0.0
    %98 = vmatpush1.msra.mxu0 0.0
    %99 = vmatprep.subr.mxu0 0.0
    %100 = vmatpush1.msra.mxu0 0.0
    %101 = vmatprep.subr.mxu0 0.0
    %102 = vmatpush1.msra.mxu0 0.0
    %103 = vmatprep.subr.mxu0 0.0
    %104 = vmatpush1.msra.mxu0 0.0
    %105 = vmatprep.subr.mxu0 0.0
    %106 = vmatpush1.msra.mxu0 0.0
    %107 = vmatprep.subr.mxu0 0.0
    %108 = vmatpush1.msra.mxu0 0.0
    %109 = vmatprep.subr.mxu0 0.0
    %110 = vmatpush1.msra.mxu0 0.0
    %111 = vmatprep.subr.mxu0 0.0
    %112 = vmatpush1.msra.mxu0 0.0
    %113 = vmatprep.subr.mxu0 0.0
    %114 = vmatpush1.msra.mxu0 0.0
    %115 = vmatprep.mubr.f32.mxu0 0.0
    %116 = vmatmul.mubr.f32.gmra.mrb[0].mxu0 %v42
    %v117 = vpop.f32.mrb[0].mxu0
    %v118 = vadd.f32 %v33, %v117
    %v119 = vpop.f32.mrb[0].mxu0
    %v120 = vadd.f32 %v37, %v119
    %121 = vdwg.mxu0
    %v122 = vmax.f32 %v118, 0.0
    %v123 = vmax.f32 %v120, 0.0
    %v124 = vld [vmem:[%s3] sm:$0xff]
    %v125 = vld [vmem:[%s3 + $0x8] sm:$0xff]
    %v126 = vld [vmem:[%s3 + $0x10] sm:$0xff]
    %v127 = vld [vmem:[%s3 + $0x18] sm:$0xff]
    %v128 = vld [vmem:[%s3 + $0x20] sm:$0xff]
    %v129 = vld [vmem:[%s3 + $0x28] sm:$0xff]
    %v130 = vld [vmem:[%s3 + $0x30] sm:$0xff]
    %v131 = vld [vmem:[%s3 + $0x38] sm:$0xff]
    %v132 = vld [vmem:[%s3 + $0x40] sm:$0xff]
    %v133 = vld [vmem:[%s3 + $0x48] sm:$0xff]
    %v134 = vld [vmem:[%s3 + $0x50] sm:$0xff]
    %v135 = vld [vmem:[%s3 + $0x58] sm:$0xff]
    %v136 = vld [vmem:[%s3 + $0x60] sm:$0xff]
    %v137 = vld [vmem:[%s3 + $0x68] sm:$0xff]
    %v138 = vld [vmem:[%s3 + $0x70] sm:$0xff]
    %v139 = vld [vmem:[%s3 + $0x78] sm:$0xff]
    %v140 = vld [vmem:[%s3 + $0x80] sm:$0xff]
    %v141 = vld [vmem:[%s3 + $0x88] sm:$0xff]
    %v142 = vld [vmem:[%s3 + $0x90] sm:$0xff]
    %v143 = vld [vmem:[%s3 + $0x98] sm:$0xff]
    %v144 = vld [vmem:[%s3 + $0xa0] sm:$0xff]
    %v145 = vld [vmem:[%s3 + $0xa8] sm:$0xff]
    %v146 = vld [vmem:[%s3 + $0xb0] sm:$0xff]
    %v147 = vld [vmem:[%s3 + $0xb8] sm:$0xff]
    %v148 = vld [vmem:[%s3 + $0xc0] sm:$0xff]
    %v149 = vld [vmem:[%s3 + $0xc8] sm:$0xff]
    %v150 = vld [vmem:[%s3 + $0xd0] sm:$0xff]
    %v151 = vld [vmem:[%s3 + $0xd8] sm:$0xff]
    %v152 = vld [vmem:[%s3 + $0xe0] sm:$0xff]
    %v153 = vld [vmem:[%s3 + $0xe8] sm:$0xff]
    %v154 = vld [vmem:[%s3 + $0xf0] sm:$0xff]
    %v155 = vld [vmem:[%s3 + $0xf8] sm:$0xff]
    %v156 = vld [vmem:[%s4] sm:$0x1]
    %v158 = vlaneseq
    %v159 = vshrl.u32 %v158, 7
    %v160 = vsub.s32 0, %v159
    %v161 = vrot.slane %v156, %v160
    %163 = vmatprep.subr.mxu0 0.0
    %164 = vmatpush1.msra.mxu0 %v124
    %165 = vmatprep.subr.mxu0 0.0
    %166 = vmatpush1.msra.mxu0 %v125
    %167 = vmatprep.subr.mxu0 0.0
    %168 = vmatpush1.msra.mxu0 %v126
    %169 = vmatprep.subr.mxu0 0.0
    %170 = vmatpush1.msra.mxu0 %v127
    %171 = vmatprep.subr.mxu0 0.0
    %172 = vmatpush1.msra.mxu0 %v128
    %173 = vmatprep.subr.mxu0 0.0
    %174 = vmatpush1.msra.mxu0 %v129
    %175 = vmatprep.subr.mxu0 0.0
    %176 = vmatpush1.msra.mxu0 %v130
    %177 = vmatprep.subr.mxu0 0.0
    %178 = vmatpush1.msra.mxu0 %v131
    %179 = vmatprep.subr.mxu0 0.0
    %180 = vmatpush1.msra.mxu0 %v132
    %181 = vmatprep.subr.mxu0 0.0
    %182 = vmatpush1.msra.mxu0 %v133
    %183 = vmatprep.subr.mxu0 0.0
    %184 = vmatpush1.msra.mxu0 %v134
    %185 = vmatprep.subr.mxu0 0.0
    %186 = vmatpush1.msra.mxu0 %v135
    %187 = vmatprep.subr.mxu0 0.0
    %188 = vmatpush1.msra.mxu0 %v136
    %189 = vmatprep.subr.mxu0 0.0
    %190 = vmatpush1.msra.mxu0 %v137
    %191 = vmatprep.subr.mxu0 0.0
    %192 = vmatpush1.msra.mxu0 %v138
    %193 = vmatprep.subr.mxu0 0.0
    %194 = vmatpush1.msra.mxu0 %v139
    %195 = vmatprep.subr.mxu0 0.0
    %196 = vmatpush1.msra.mxu0 %v140
    %197 = vmatprep.subr.mxu0 0.0
    %198 = vmatpush1.msra.mxu0 %v141
    %199 = vmatprep.subr.mxu0 0.0
    %200 = vmatpush1.msra.mxu0 %v142
    %201 = vmatprep.subr.mxu0 0.0
    %202 = vmatpush1.msra.mxu0 %v143
    %203 = vmatprep.subr.mxu0 0.0
    %204 = vmatpush1.msra.mxu0 %v144
    %205 = vmatprep.subr.mxu0 0.0
    %206 = vmatpush1.msra.mxu0 %v145
    %207 = vmatprep.subr.mxu0 0.0
    %208 = vmatpush1.msra.mxu0 %v146
    %209 = vmatprep.subr.mxu0 0.0
    %210 = vmatpush1.msra.mxu0 %v147
    %211 = vmatprep.subr.mxu0 0.0
    %212 = vmatpush1.msra.mxu0 %v148
    %213 = vmatprep.subr.mxu0 0.0
    %214 = vmatpush1.msra.mxu0 %v149
    %215 = vmatprep.subr.mxu0 0.0
    %216 = vmatpush1.msra.mxu0 %v150
    %217 = vmatprep.subr.mxu0 0.0
    %218 = vmatpush1.msra.mxu0 %v151
    %219 = vmatprep.subr.mxu0 0.0
    %220 = vmatpush1.msra.mxu0 %v152
    %221 = vmatprep.subr.mxu0 0.0
    %222 = vmatpush1.msra.mxu0 %v153
    %223 = vmatprep.subr.mxu0 0.0
    %224 = vmatpush1.msra.mxu0 %v154
    %225 = vmatprep.subr.mxu0 0.0
    %226 = vmatpush1.msra.mxu0 %v155
    %227 = vmatprep.mubr.f32.mxu0 %v123
    %228 = vmatmul.mubr.f32.gmra.mrb[0].mxu0 %v122
    %v229 = vpop.f32.mrb[0].mxu0
    %v230 = vadd.f32 %v161, %v229
    %v231 = vpop.f32.mrb[0].mxu0
    %232 = vdwg.mxu0
    %vm233 = vcmask 80896
    %234 = vst.msk [vmem:[#allocation2] sm:$0xff] %vm233, %v230
    // Predicated region
    $region22: #{mlp_forward.1} parent=1 // pred_check
      _
    $region23: #{mlp_forward.1} parent=1 // pred_check_branch
      %236 = sbr.rel (0) target = $region25
    $region24: #{mlp_forward.1} parent=1 // pred_region
      %s238 = ssub.s32 128, 32
      %239 = vsyncadd [#allocation3], %s238
      %s240 = sshll.u32 [#allocation2], 4
      %s241 = int_to_ptr.vmem [resolvable:$true] %s240
      %246 = dma.vmem_to_hbm [thread:$0]  %s241, 32, %s5, [#allocation3], 32, 32, 2
    $region25: #{mlp_forward.1} parent=1 // pred_fallthru
      _
    // Predicated region
    $region26: #{mlp_forward.1} parent=1 // pred_check
      _
    $region27: #{mlp_forward.1} parent=1 // pred_check_branch
      %248 = sbr.rel (0) target = $region29
    $region28: #{mlp_forward.1} parent=1 // pred_region
      %249 = dma.done [#allocation3], 128
    $region29: #{mlp_forward.1} parent=1 // pred_fallthru
      _
    %250 = vsyncpa [#allocation3], 1

</llo_original>
